<compile_context>
chip_gen: v5e
topology: v5e:2x2
jax: 0.10.0
libtpu: 0.0.40
codegen_flags: <defaults>
</compile_context>

<pallas_src>
import functools

import jax
import jax.numpy as jnp
from jax.experimental import pallas as pl
from jax.experimental.pallas import tpu as pltpu


def _postnet_kernel(x_ref, w_ref, p_ref, o_ref, *,
                    sqrt_c, inv_sqrt_c, use_act, use_norm, ln_eps):
    x = x_ref[...].astype(jnp.float32)                           # [TN, H]

    # ---- 1) logmap0 on the Poincare ball (curvature c) ----
    # Single rsqrt (EUP) instead of sqrt + two divides.
    sq_norm = jnp.sum(x * x, axis=-1, keepdims=True)             # [TN, 1]
    inv_norm = jax.lax.rsqrt(jnp.maximum(sq_norm, 1e-15))
    norm = sq_norm * inv_norm                                    # == sqrt(sq_norm)
    arg = jnp.clip(sqrt_c * norm, -1.0 + 1e-7, 1.0 - 1e-7)       # artanh clamp
    artanh = 0.5 * (jnp.log1p(arg) - jnp.log1p(-arg))
    euc = x * (artanh * inv_norm * inv_sqrt_c)                   # [TN, H], f32

    # ---- 2) linear projection (MXU): operands in the weight dtype (bf16 by
    #         default -> native MXU path), accumulation in f32. ----
    out = jnp.dot(euc.astype(w_ref.dtype), w_ref[...],
                  preferred_element_type=jnp.float32)            # [TN, O]
    out = out + p_ref[0:1, :]                                    # + bias

    # ---- 3) optional activation (ReLU) ----
    if use_act:
        out = jnp.maximum(out, 0.0)

    # ---- 4) optional LayerNorm over the output dim ----
    if use_norm:
        mean = jnp.mean(out, axis=-1, keepdims=True)
        centered = out - mean
        var = jnp.mean(centered * centered, axis=-1, keepdims=True)
        out = centered * jax.lax.rsqrt(var + ln_eps)
        out = out * p_ref[1:2, :] + p_ref[2:3, :]                # gamma, beta

    # ---- 5) dropout p=0.0 -> identity ----
    # TODO(synk): training-mode dropout (pltpu.prng_seed / prng_random_bits) not
    # implemented; the module is configured with p=0.0 here.
    o_ref[...] = out.astype(o_ref.dtype)


def _round_up(v, m):
    return (v + m - 1) // m * m


def _vmem_capacity_bytes():
    """Per-generation VMEM capacity (128 MiB v5e/v6e, 64 MiB v7x)."""
    try:
        info = pltpu.get_tpu_info()
        cap = getattr(info, "vmem_capacity_bytes", None)
        if cap:
            return int(cap)
    except Exception:
        pass
    return 64 << 20  # conservative: v7x per-TensorCore VMEM


def postnet_forward(x, w, b, gamma, beta, *, c=1.0, use_act=True, use_norm=True,
                    ln_eps=1e-5, tile_rows=1024, mxu_dtype=jnp.bfloat16):
    """x: [B, S, H] (points on the Poincare ball).
       w: [H, O] (already-transposed nn.Linear weight).
       b, gamma, beta: [O].  Returns [B, S, O] in x.dtype."""
    B, S, H = x.shape
    Hw, O = w.shape
    assert Hw == H, "weight shape must be [hidden_dim, output_dim]"
    N = B * S

    # Free, contiguous reshape (no extra HBM pass).
    x2 = x.reshape(N, H)
    w2 = w.astype(mxu_dtype)
    # Fuse bias/gamma/beta into one tiny resident (3, O) f32 operand.
    params = jnp.stack([b.astype(jnp.float32),
                        gamma.astype(jnp.float32),
                        beta.astype(jnp.float32)], axis=0)

    f32 = 4
    x_bytes = jnp.dtype(x.dtype).itemsize
    w_bytes = jnp.dtype(w2.dtype).itemsize
    out_bytes = x_bytes

    # ---- VMEM budget & row tile ----
    capacity = _vmem_capacity_bytes()
    budget = capacity - (8 << 20)  # headroom for compiler scratch / spills

    # Index-invariant operands; assume the pipeliner may double-buffer them.
    const_bytes = 2 * H * O * w_bytes + 2 * 3 * O * f32

    def _tile_bytes(tn):
        io = 2 * tn * H * x_bytes + 2 * tn * O * out_bytes     # double-buffered I/O tiles
        live = tn * (2 * H + 3 * O) * f32                      # x_f32/euc + out/centered/tmp
        return io + live

    # bf16 inputs pack two rows per sublane -> keep tn a multiple of 16 then.
    row_align = 8 if x_bytes >= 4 else 16

    # TODO(synk): if the weight itself exceeds the VMEM budget (very large H*O), a
    # K/O reduction grid axis with an f32 accumulator is needed; not implemented.
    assert const_bytes + _tile_bytes(row_align) <= budget, (
        "weight too large to keep VMEM-resident; needs K/O tiling")

    tn = min(_round_up(int(tile_rows), row_align), _round_up(N, row_align))
    while tn > row_align and const_bytes + _tile_bytes(tn) > budget:
        tn = max(row_align, _round_up(tn // 2, row_align))

    grid = pl.cdiv(N, tn)
    # v7x has 2 TensorCores: prefer an even "parallel" step count so cores balance
    # (harmless on single-TC v5e/v6e).
    if grid > 1 and grid % 2 == 1:
        tn = max(row_align, _round_up(pl.cdiv(N, grid + 1), row_align))
        grid = pl.cdiv(N, tn)

    vmem_limit = int(min(capacity,
                         max(32 << 20, const_bytes + _tile_bytes(tn) + (4 << 20))))

    kernel = functools.partial(
        _postnet_kernel,
        sqrt_c=float(c) ** 0.5,
        inv_sqrt_c=1.0 / (float(c) ** 0.5),
        use_act=bool(use_act),
        use_norm=bool(use_norm),
        ln_eps=float(ln_eps),
    )

    cost = pl.CostEstimate(
        flops=2 * N * H * O,
        transcendentals=4 * N,  # rsqrt + 2x log1p + LN rsqrt per row
        bytes_accessed=(N * H * x_bytes + N * O * out_bytes
                        + H * O * w_bytes + 3 * O * f32),
    )

    out2 = pl.pallas_call(
        kernel,
        out_shape=jax.ShapeDtypeStruct((N, O), x.dtype),
        grid_spec=pltpu.PrefetchScalarGridSpec(
            num_scalar_prefetch=0,
            grid=(grid,),
            in_specs=[
                # Row tile of x; H is the full array dim (legal for any H, no padding).
                pl.BlockSpec((tn, H), lambda i: (i, 0)),
                # Index-invariant operands (resident across the whole grid):
                pl.BlockSpec((H, O), lambda i: (0, 0)),   # weight (mxu_dtype)
                pl.BlockSpec((3, O), lambda i: (0, 0)),   # bias / gamma / beta (f32)
            ],
            out_specs=pl.BlockSpec((tn, O), lambda i: (i, 0)),
        ),
        compiler_params=pltpu.CompilerParams(
            dimension_semantics=("parallel",),
            vmem_limit_bytes=vmem_limit,
        ),
        cost_estimate=cost,
    )(x2, w2, params)

    return out2.reshape(B, S, O)


def _reference(x, w, b, gamma, beta, c=1.0, use_act=True, use_norm=True, ln_eps=1e-5):
    sqrt_c = c ** 0.5
    norm = jnp.sqrt(jnp.maximum(jnp.sum(x * x, axis=-1, keepdims=True), 1e-15))
    arg = jnp.clip(sqrt_c * norm, -1.0 + 1e-7, 1.0 - 1e-7)
    euc = x * jnp.arctanh(arg) / (sqrt_c * norm)
    out = euc @ w + b
    if use_act:
        out = jnp.maximum(out, 0.0)
    if use_norm:
        mean = jnp.mean(out, axis=-1, keepdims=True)
        var = jnp.mean((out - mean) ** 2, axis=-1, keepdims=True)
        out = (out - mean) * jax.lax.rsqrt(var + ln_eps) * gamma + beta
    return out


if __name__ == "__main__":
    # Small shapes consistent with the module: [batch, seq, hidden] -> [batch, seq, output]
    B, S, H, O = 2, 8, 32, 32

    key = jax.random.PRNGKey(0)
    kx, kw, kb = jax.random.split(key, 3)

    # Points inside the Poincare ball (norm < 1): scale down random normals.
    x = 0.1 * jax.random.normal(kx, (B, S, H), dtype=jnp.float32)

    # Deterministic parameter init (nn.Linear-like uniform bound 1/sqrt(H)).
    bound = 1.0 / (H ** 0.5)
    w = jax.random.uniform(kw, (H, O), minval=-bound, maxval=bound, dtype=jnp.float32)
    b = jax.random.uniform(kb, (O,), minval=-bound, maxval=bound, dtype=jnp.float32)
    gamma = jnp.ones((O,), dtype=jnp.float32)   # LayerNorm weight init
    beta = jnp.zeros((O,), dtype=jnp.float32)   # LayerNorm bias init

    ref = _reference(x, w, b, gamma, beta)

    # Default (bf16 MXU operands, f32 accumulation) -- bf16-level tolerance.
    out_bf16 = jax.block_until_ready(
        postnet_forward(x, w, b, gamma, beta, c=1.0, use_act=True, use_norm=True))
    assert out_bf16.shape == (B, S, O)
    err_bf16 = float(jnp.max(jnp.abs(out_bf16 - ref)))
    assert err_bf16 < 3e-2, f"bf16-MXU path mismatch vs. JAX reference: {err_bf16}"

    # f32 MXU operands -- tight tolerance.
    out_f32 = jax.block_until_ready(
        postnet_forward(x, w, b, gamma, beta, c=1.0, use_act=True, use_norm=True,
                        mxu_dtype=jnp.float32))
    err_f32 = float(jnp.max(jnp.abs(out_f32 - ref)))
    assert err_f32 < 1e-4, f"f32-MXU path mismatch vs. JAX reference: {err_f32}"

    # Multi-step grid with a partial last row tile (N=24, tn=16 -> grid=2).
    B2, S2 = 3, 8
    x2 = 0.1 * jax.random.normal(jax.random.PRNGKey(1), (B2, S2, H), dtype=jnp.float32)
    ref2 = _reference(x2, w, b, gamma, beta)
    out2 = jax.block_until_ready(
        postnet_forward(x2, w, b, gamma, beta, c=1.0, use_act=True, use_norm=True,
                        tile_rows=16, mxu_dtype=jnp.float32))
    err2 = float(jnp.max(jnp.abs(out2 - ref2)))
    assert out2.shape == (B2, S2, O)
    assert err2 < 1e-4, f"partial-tile path mismatch vs. JAX reference: {err2}"

    print("KERNEL_OK")
</pallas_src>

<mosaic_0001>
module attributes {stable_mosaic.version = 11 : i64} {
  func.func @_postnet_kernel(%arg0: i32, %arg1: memref<16x32xf32, #tpu.memory_space<vmem>>, %arg2: memref<32x32xbf16, #tpu.memory_space<vmem>>, %arg3: memref<3x32xf32, #tpu.memory_space<vmem>>, %arg4: memref<16x32xf32, #tpu.memory_space<vmem>>) attributes {dimension_semantics = [#tpu.dimension_semantics<parallel>], iteration_bounds = array<i64: 1>, scalar_prefetch = 0 : i64, scratch_operands = 0 : i64, tpu.core_type = #tpu.core_type<tc>, window_params = [{transform_indices = @transform_0, window_bounds = array<i64: 16, 32>}, {pipeline_mode = #tpu.pipeline_mode<synchronous>, transform_indices = @transform_1, window_bounds = array<i64: 32, 32>}, {pipeline_mode = #tpu.pipeline_mode<synchronous>, transform_indices = @transform_2, window_bounds = array<i64: 3, 32>}, {transform_indices = @transform_3, window_bounds = array<i64: 16, 32>}]} {
    %c0 = arith.constant 0 : index
    %c0_0 = arith.constant 0 : index
    %0 = vector.load %arg1[%c0, %c0_0] : memref<16x32xf32, #tpu.memory_space<vmem>>, vector<16x32xf32>
    %1 = arith.mulf %0, %0 : vector<16x32xf32>
    %cst = arith.constant dense<0.000000e+00> : vector<16xf32>
    %2 = vector.multi_reduction <add>, %1, %cst [1] : vector<16x32xf32> to vector<16xf32>
    %3 = vector.shape_cast %2 : vector<16xf32> to vector<16x1xf32>
    %cst_1 = arith.constant 1.000000e-15 : f32
    %4 = vector.broadcast %cst_1 : f32 to vector<16x1xf32>
    %5 = arith.maximumf %3, %4 : vector<16x1xf32>
    %6 = math.rsqrt %5 : vector<16x1xf32>
    %7 = arith.mulf %3, %6 : vector<16x1xf32>
    %cst_2 = arith.constant 1.000000e+00 : f32
    %8 = vector.broadcast %cst_2 : f32 to vector<16x1xf32>
    %9 = arith.mulf %8, %7 : vector<16x1xf32>
    %cst_3 = arith.constant -0.99999988 : f32
    %cst_4 = arith.constant 0.99999988 : f32
    %10 = vector.broadcast %cst_3 : f32 to vector<16x1xf32>
    %11 = arith.maximumf %10, %9 : vector<16x1xf32>
    %12 = vector.broadcast %cst_4 : f32 to vector<16x1xf32>
    %13 = arith.minimumf %12, %11 : vector<16x1xf32>
    %14 = math.log1p %13 : vector<16x1xf32>
    %cst_5 = arith.constant 0.000000e+00 : f32
    %15 = vector.broadcast %cst_5 : f32 to vector<16x1xf32>
    %16 = arith.subf %15, %13 : vector<16x1xf32>
    %17 = math.log1p %16 : vector<16x1xf32>
    %18 = arith.subf %14, %17 : vector<16x1xf32>
    %cst_6 = arith.constant 5.000000e-01 : f32
    %19 = vector.broadcast %cst_6 : f32 to vector<16x1xf32>
    %20 = arith.mulf %19, %18 : vector<16x1xf32>
    %21 = arith.mulf %20, %6 : vector<16x1xf32>
    %cst_7 = arith.constant 1.000000e+00 : f32
    %22 = vector.broadcast %cst_7 : f32 to vector<16x1xf32>
    %23 = arith.mulf %21, %22 : vector<16x1xf32>
    %24 = vector.broadcast %23 : vector<16x1xf32> to vector<16x32xf32>
    %25 = arith.mulf %0, %24 : vector<16x32xf32>
    %26 = arith.truncf %25 : vector<16x32xf32> to vector<16x32xbf16>
    %c0_8 = arith.constant 0 : index
    %c0_9 = arith.constant 0 : index
    %27 = vector.load %arg2[%c0_8, %c0_9] : memref<32x32xbf16, #tpu.memory_space<vmem>>, vector<32x32xbf16>
    %cst_10 = arith.constant dense<0.000000e+00> : vector<16x32xf32>
    %28 = tpu.matmul %26, %27, %cst_10 {dimension_numbers = #tpu.dot_dimension_numbers<[1], [0], [0], [1], [0, 0, 1, 1], [], []>} : vector<16x32xbf16>, vector<32x32xbf16>, vector<16x32xf32> -> vector<16x32xf32>
    %c0_11 = arith.constant 0 : index
    %c0_12 = arith.constant 0 : index
    %29 = vector.load %arg3[%c0_11, %c0_12] : memref<3x32xf32, #tpu.memory_space<vmem>>, vector<1x32xf32>
    %30 = vector.broadcast %29 : vector<1x32xf32> to vector<16x32xf32>
    %31 = arith.addf %28, %30 : vector<16x32xf32>
    %cst_13 = arith.constant 0.000000e+00 : f32
    %32 = vector.broadcast %cst_13 : f32 to vector<16x32xf32>
    %33 = arith.maximumf %31, %32 : vector<16x32xf32>
    %cst_14 = arith.constant dense<0.000000e+00> : vector<16xf32>
    %34 = vector.multi_reduction <add>, %33, %cst_14 [1] : vector<16x32xf32> to vector<16xf32>
    %35 = vector.shape_cast %34 : vector<16xf32> to vector<16x1xf32>
    %cst_15 = arith.constant 3.200000e+01 : f32
    %36 = vector.broadcast %cst_15 : f32 to vector<16x1xf32>
    %37 = arith.divf %35, %36 : vector<16x1xf32>
    %38 = vector.broadcast %37 : vector<16x1xf32> to vector<16x32xf32>
    %39 = arith.subf %33, %38 : vector<16x32xf32>
    %40 = arith.mulf %39, %39 : vector<16x32xf32>
    %cst_16 = arith.constant dense<0.000000e+00> : vector<16xf32>
    %41 = vector.multi_reduction <add>, %40, %cst_16 [1] : vector<16x32xf32> to vector<16xf32>
    %42 = vector.shape_cast %41 : vector<16xf32> to vector<16x1xf32>
    %cst_17 = arith.constant 3.200000e+01 : f32
    %43 = vector.broadcast %cst_17 : f32 to vector<16x1xf32>
    %44 = arith.divf %42, %43 : vector<16x1xf32>
    %cst_18 = arith.constant 9.99999974E-6 : f32
    %45 = vector.broadcast %cst_18 : f32 to vector<16x1xf32>
    %46 = arith.addf %44, %45 : vector<16x1xf32>
    %47 = math.rsqrt %46 : vector<16x1xf32>
    %48 = vector.broadcast %47 : vector<16x1xf32> to vector<16x32xf32>
    %49 = arith.mulf %39, %48 : vector<16x32xf32>
    %c1 = arith.constant 1 : index
    %c0_19 = arith.constant 0 : index
    %50 = vector.load %arg3[%c1, %c0_19] : memref<3x32xf32, #tpu.memory_space<vmem>>, vector<1x32xf32>
    %51 = vector.broadcast %50 : vector<1x32xf32> to vector<16x32xf32>
    %52 = arith.mulf %49, %51 : vector<16x32xf32>
    %c2 = arith.constant 2 : index
    %c0_20 = arith.constant 0 : index
    %53 = vector.load %arg3[%c2, %c0_20] : memref<3x32xf32, #tpu.memory_space<vmem>>, vector<1x32xf32>
    %54 = vector.broadcast %53 : vector<1x32xf32> to vector<16x32xf32>
    %55 = arith.addf %52, %54 : vector<16x32xf32>
    %c0_21 = arith.constant 0 : index
    %c0_22 = arith.constant 0 : index
    %56 = vector.load %arg4[%c0_21, %c0_22] : memref<16x32xf32, #tpu.memory_space<vmem>>, vector<16x32xf32>
    tpu.vector_store %arg4[%c0_21, %c0_22], %55 {strides = array<i32>} : memref<16x32xf32, #tpu.memory_space<vmem>>, vector<16x32xf32>,
    return
  }
  func.func @transform_0(%arg0: i32) -> (i32, i32) {
    %c0_i32 = arith.constant 0 : i32
    %c0_i32_0 = arith.constant 0 : i32
    return %arg0, %c0_i32 : i32, i32
  }
  func.func @transform_1(%arg0: i32) -> (i32, i32) {
    %c0_i32 = arith.constant 0 : i32
    %c0_i32_0 = arith.constant 0 : i32
    %c0_i32_1 = arith.constant 0 : i32
    return %c0_i32, %c0_i32_0 : i32, i32
  }
  func.func @transform_2(%arg0: i32) -> (i32, i32) {
    %c0_i32 = arith.constant 0 : i32
    %c0_i32_0 = arith.constant 0 : i32
    %c0_i32_1 = arith.constant 0 : i32
    return %c0_i32, %c0_i32_0 : i32, i32
  }
  func.func @transform_3(%arg0: i32) -> (i32, i32) {
    %c0_i32 = arith.constant 0 : i32
    %c0_i32_0 = arith.constant 0 : i32
    return %arg0, %c0_i32 : i32, i32
  }
}

</mosaic_0001>

<llo_original>
// kernel: tpu_custom_call.1
$region0: #{tpu_custom_call.1}
  #allocation0 [shape = 'u32[]', space=smem, size = 0x4, offset = 0x4, fixed_abs, tag = 'smem constant byte address 0x4 - core index']
  #allocation1 [shape = 'u32[72,128]{1,0:T(1,128)}', space=vmem, size = 0x9000, scoped, tag = 'internal scratch']
  %s0 = inlined_call_operand.hbm [shape: f32[16,32], index: 0, kind: input, shape index: {}]
  %s1 = inlined_call_operand.hbm [shape: bf16[32,32], index: 1, kind: input, shape index: {}]
  %s2 = inlined_call_operand.hbm [shape: f32[3,32], index: 2, kind: input, shape index: {}]
  %s3 = inlined_call_operand.hbm [shape: f32[16,32], index: 3, kind: output, shape index: {}]
  %s4 = sld [smem:[#allocation0]]
  $region34: #{tpu_custom_call.1} parent=0
    _
  %s6 = ssub.s32 1, %s4
  %s7 = scalar_select 0, %s6, %s4
  $region1: #{tpu_custom_call.1} parent=0
    #allocation2 [shape = 'u8[8192]{0}', space=vmem, size = 0x2000, scoped, tag = 'input window, operand 0, single buffered']
    #allocation3 [shape = 's32[1]{0}', space=sflag, size = 0x4, scoped, tag = 'scoped memory for tpu_custom_call.1']
    #allocation4 [shape = 's32[1]{0}', space=sflag, size = 0x4, scoped, tag = 'scoped memory for tpu_custom_call.1']
    #allocation5 [shape = 'u8[8192]{0}', space=vmem, size = 0x2000, scoped, tag = 'input window, operand 1, single buffered']
    #allocation6 [shape = 's32[1]{0}', space=sflag, size = 0x4, scoped, tag = 'scoped memory for tpu_custom_call.1']
    #allocation7 [shape = 'u8[2048]{0}', space=vmem, size = 0x800, scoped, tag = 'input window, operand 2, single buffered']
    #allocation8 [shape = 'u8[8192]{0}', space=vmem, size = 0x2000, scoped, tag = 'output window, operand 0, single buffered']
    %8 = vsyncpa [#allocation3], 0
    %9 = vsyncpa [#allocation6], 0
    %10 = vsyncpa [#allocation4], 0
    // Predicated region
    $region2: #{tpu_custom_call.1} parent=1 // pred_check
      _
    $region3: #{tpu_custom_call.1} parent=1 // pred_check_branch
      %12 = sbr.rel (0) target = $region5
    $region4: #{tpu_custom_call.1} parent=1 // pred_region
      %14 = vsyncadd [#allocation3], 0
      %s15 = sshll.u32 %s0, 4
      %s16 = int_to_ptr.hbm [resolvable:$true] %s15
      %s17 = sshll.u32 [#allocation2], 4
      %s18 = int_to_ptr.vmem [resolvable:$true] %s17
      %23 = dma.hbm_to_vmem [thread:$0]  %s16, 256, %s18, [#allocation3], 128, 128, 8
    $region5: #{tpu_custom_call.1} parent=1 // pred_fallthru
      _
    // Predicated region
    $region6: #{tpu_custom_call.1} parent=1 // pred_check
      _
    $region7: #{tpu_custom_call.1} parent=1 // pred_check_branch
      %25 = sbr.rel (0) target = $region9
    $region8: #{tpu_custom_call.1} parent=1 // pred_region
      %27 = vsyncadd [#allocation6], 0
      %s28 = sshll.u32 %s1, 4
      %s29 = int_to_ptr.hbm [resolvable:$true] %s28
      %s30 = sshll.u32 [#allocation5], 4
      %s31 = int_to_ptr.vmem [resolvable:$true] %s30
      %36 = dma.hbm_to_vmem [thread:$0]  %s29, 256, %s31, [#allocation6], 64, 64, 4
    $region9: #{tpu_custom_call.1} parent=1 // pred_fallthru
      _
    // Predicated region
    $region10: #{tpu_custom_call.1} parent=1 // pred_check
      _
    $region11: #{tpu_custom_call.1} parent=1 // pred_check_branch
      %38 = sbr.rel (0) target = $region13
    $region12: #{tpu_custom_call.1} parent=1 // pred_region
      %40 = vsyncadd [#allocation6], 0
      %s42 = sshll.u32 %s2, 4
      %s43 = int_to_ptr.hbm [resolvable:$true] %s42
      %s44 = sshll.u32 [#allocation7], 4
      %s45 = int_to_ptr.vmem [resolvable:$true] %s44
      %47 = dma.hbm_to_vmem [thread:$0]  %s43, 64, %s45, [#allocation6]
    $region13: #{tpu_custom_call.1} parent=1 // pred_fallthru
      _
    // Predicated region
    $region14: #{tpu_custom_call.1} parent=1 // pred_check
      _
    $region15: #{tpu_custom_call.1} parent=1 // pred_check_branch
      %49 = sbr.rel (0) target = $region17
    $region16: #{tpu_custom_call.1} parent=1 // pred_region
      %51 = dma.done [#allocation3], 256
    $region17: #{tpu_custom_call.1} parent=1 // pred_fallthru
      _
    // Predicated region
    $region18: #{tpu_custom_call.1} parent=1 // pred_check
      _
    $region19: #{tpu_custom_call.1} parent=1 // pred_check_branch
      %53 = sbr.rel (0) target = $region21
    $region20: #{tpu_custom_call.1} parent=1 // pred_region
      %55 = dma.done [#allocation6], 256
    $region21: #{tpu_custom_call.1} parent=1 // pred_fallthru
      _
    // Predicated region
    $region22: #{tpu_custom_call.1} parent=1 // pred_check
      _
    $region23: #{tpu_custom_call.1} parent=1 // pred_check_branch
      %57 = sbr.rel (0) target = $region25
    $region24: #{tpu_custom_call.1} parent=1 // pred_region
      %59 = dma.done [#allocation6], 64
    $region25: #{tpu_custom_call.1} parent=1 // pred_fallthru
      _
    %v61 = vld [vmem:[#allocation2] sm:$0xff]
    %v62 = vld [vmem:[#allocation2 + $0x8] sm:$0xff]
    %v63 = vmul.f32 %v61, %v61
    %v64 = vmul.f32 %v62, %v62
    %vm65 = vcmask 261120
    %v66 = vsel %vm65, %v63, 0.0
    %67 = vadd.xlane.f32.xlu0 %v66
    %v68 = vpop.xlane.xlu0 %67
    %v69 = vsel %vm65, %v64, 0.0
    %70 = vadd.xlane.f32.xlu0 %v69
    %v71 = vpop.xlane.xlu0 %70
    %v72 = vmax.f32 %v68, 1e-15
    %v73 = vmax.f32 %v71, 1e-15
    %v74 = vrsqrt.pop %v72
    %v75 = vmul.f32 %v74, %v72
    %v76 = vmul.f32 %v75, %v74
    %v77 = vmul.f32 0.5, %v76
    %v78 = vsub.f32 1.5, %v77
    %v79 = vmul.f32 %v74, %v78
    %vm80 = vweird.f32 %v72
    %vm81 = vweird.f32 %v74
    %vm82 = vmor %vm80, %vm81
    %v83 = vsel %vm82, %v74, %v79
    %v84 = vrsqrt.pop %v73
    %v85 = vmul.f32 %v84, %v73
    %v86 = vmul.f32 %v85, %v84
    %v87 = vmul.f32 0.5, %v86
    %v88 = vsub.f32 1.5, %v87
    %v89 = vmul.f32 %v84, %v88
    %vm90 = vweird.f32 %v73
    %vm91 = vweird.f32 %v84
    %vm92 = vmor %vm90, %vm91
    %v93 = vsel %vm92, %v84, %v89
    %v94 = vmul.f32 %v68, %v83
    %v95 = vmul.f32 %v71, %v93
    %v96 = vmax.f32 %v94, -0.9999999
    %v97 = vmax.f32 %v95, -0.9999999
    %v98 = vmin.f32 %v96, 0.9999999
    %v99 = vmin.f32 %v97, 0.9999999
    %v100 = vadd.f32 %v98, 1.0
    %v101 = vlog2.pop %v100
    %v102 = vmul.f32 %v101, 0.6931472
    %v103 = vmul.f32 -0.5, %v98
    %v104 = vadd.f32 %v103, 1.0
    %v105 = vmul.f32 %v104, %v98
    %v106 = vand.u32 2147483647, %v98
    %vm107 = vcmp.lt.f32.partialorder %v106, 0.0004427343
    %v108 = vsel %vm107, %v105, %v102
    %v109 = vadd.f32 %v99, 1.0
    %v110 = vlog2.pop %v109
    %v111 = vmul.f32 %v110, 0.6931472
    %v112 = vmul.f32 -0.5, %v99
    %v113 = vadd.f32 %v112, 1.0
    %v114 = vmul.f32 %v113, %v99
    %v115 = vand.u32 2147483647, %v99
    %vm116 = vcmp.lt.f32.partialorder %v115, 0.0004427343
    %v117 = vsel %vm116, %v114, %v111
    %v118 = vsub.f32 0.0, %v98
    %v119 = vsub.f32 0.0, %v99
    %v120 = vadd.f32 %v118, 1.0
    %v121 = vlog2.pop %v120
    %v122 = vmul.f32 %v121, 0.6931472
    %v123 = vmul.f32 -0.5, %v118
    %v124 = vadd.f32 %v123, 1.0
    %v125 = vmul.f32 %v124, %v118
    %v126 = vand.u32 2147483647, %v118
    %vm127 = vcmp.lt.f32.partialorder %v126, 0.0004427343
    %v128 = vsel %vm127, %v125, %v122
    %v129 = vadd.f32 %v119, 1.0
    %v130 = vlog2.pop %v129
    %v131 = vmul.f32 %v130, 0.6931472
    %v132 = vmul.f32 -0.5, %v119
    %v133 = vadd.f32 %v132, 1.0
    %v134 = vmul.f32 %v133, %v119
    %v135 = vand.u32 2147483647, %v119
    %vm136 = vcmp.lt.f32.partialorder %v135, 0.0004427343
    %v137 = vsel %vm136, %v134, %v131
    %v138 = vsub.f32 %v108, %v128
    %v139 = vsub.f32 %v117, %v137
    %v140 = vmul.f32 %v138, 0.5
    %v141 = vmul.f32 %v139, 0.5
    %v142 = vmul.f32 %v140, %v83
    %v143 = vmul.f32 %v141, %v93
    %v144 = vmul.f32 %v61, %v142
    %v145 = vmul.f32 %v62, %v143
    %v146 = vpack.c.bf16 %v145, %v144
    %v147 = vld [vmem:[#allocation5] sm:$0xf]
    %v148 = vld [vmem:[#allocation5 + $0x4] sm:$0xf]
    %v149 = vld [vmem:[#allocation5 + $0x8] sm:$0xf]
    %v150 = vld [vmem:[#allocation5 + $0xc] sm:$0xf]
    %v151 = vld [vmem:[#allocation7] sm:$0x1]
    %v152 = vperm.slane %v151, 0
    %v157 = vunpack.c.l.b16 %v147
    %v158 = vunpack.c.l.b16 %v148
    %v159 = vunpack.c.l.b16 %v149
    %v160 = vunpack.c.l.b16 %v150
    %v161 = vpack.c.b16 %v158, %v157
    %v162 = vpack.c.b16 %v160, %v159
    %v166 = vsel %vm65, %v146, 0
    %168 = vmatpush.bf16.msra.mxu0 0
    %169 = vmatpush.bf16.msra.mxu0 0
    %170 = vmatpush.bf16.msra.mxu0 0
    %171 = vmatpush.bf16.msra.mxu0 0
    %172 = vmatpush.bf16.msra.mxu0 0
    %173 = vmatpush.bf16.msra.mxu0 0
    %174 = vmatpush.bf16.msra.mxu0 %v162
    %175 = vmatpush.bf16.msra.mxu0 %v161
    %176 = vmatmul.bf16.gmra.mxu0 %v166
    %v177 = vpop.f32.mrf.mxu0
    %v178 = vadd.f32 %v152, %v177
    %v179 = vpop.f32.mrf.mxu0
    %v180 = vadd.f32 %v152, %v179
    %181 = vdwg.mxu0
    %v182 = vmax.f32 %v178, 0.0
    %v183 = vmax.f32 %v180, 0.0
    %v184 = vsel %vm65, %v182, 0.0
    %185 = vadd.xlane.f32.xlu0 %v184
    %v186 = vpop.xlane.xlu0 %185
    %v187 = vsel %vm65, %v183, 0.0
    %188 = vadd.xlane.f32.xlu0 %v187
    %v189 = vpop.xlane.xlu0 %188
    %v190 = vrcp.pop 32.0
    %v191 = vmul.f32 32.0, %v190
    %v192 = vsub.f32 1.0, %v191
    %v193 = vmul.f32 %v190, %v192
    %v194 = vadd.f32 %v190, %v193
    %vm195 = vweird.f32 %v190
    %v196 = vsel %vm195, %v190, %v194
    %v197 = vmul.f32 %v186, %v196
    %v198 = vmul.f32 %v189, %v196
    %v199 = vsub.f32 %v182, %v197
    %v200 = vsub.f32 %v183, %v198
    %v201 = vmul.f32 %v199, %v199
    %v202 = vmul.f32 %v200, %v200
    %v203 = vsel %vm65, %v201, 0.0
    %204 = vadd.xlane.f32.xlu0 %v203
    %v205 = vpop.xlane.xlu0 %204
    %v206 = vsel %vm65, %v202, 0.0
    %207 = vadd.xlane.f32.xlu0 %v206
    %v208 = vpop.xlane.xlu0 %207
    %v209 = vmul.f32 %v205, %v196
    %v210 = vmul.f32 %v208, %v196
    %v211 = vadd.f32 %v209, 1e-05
    %v212 = vadd.f32 %v210, 1e-05
    %v213 = vrsqrt.pop %v211
    %v214 = vmul.f32 %v213, %v211
    %v215 = vmul.f32 %v214, %v213
    %v216 = vmul.f32 0.5, %v215
    %v217 = vsub.f32 1.5, %v216
    %v218 = vmul.f32 %v213, %v217
    %vm219 = vweird.f32 %v211
    %vm220 = vweird.f32 %v213
    %vm221 = vmor %vm219, %vm220
    %v222 = vsel %vm221, %v213, %v218
    %v223 = vrsqrt.pop %v212
    %v224 = vmul.f32 %v223, %v212
    %v225 = vmul.f32 %v224, %v223
    %v226 = vmul.f32 0.5, %v225
    %v227 = vsub.f32 1.5, %v226
    %v228 = vmul.f32 %v223, %v227
    %vm229 = vweird.f32 %v212
    %vm230 = vweird.f32 %v223
    %vm231 = vmor %vm229, %vm230
    %v232 = vsel %vm231, %v223, %v228
    %v233 = vmul.f32 %v199, %v222
    %v234 = vmul.f32 %v200, %v232
    %v235 = vld [vmem:[#allocation7 + $0x1] sm:$0x1]
    %v236 = vperm.slane %v235, 0
    %v237 = vmul.f32 %v233, %v236
    %v238 = vmul.f32 %v234, %v236
    %v239 = vld [vmem:[#allocation7 + $0x2] sm:$0x1]
    %v240 = vperm.slane %v239, 0
    %v241 = vadd.f32 %v237, %v240
    %v242 = vadd.f32 %v238, %v240
    %243 = vst.msk [vmem:[#allocation8] sm:$0xff] %vm65, %v241
    %244 = vst.msk [vmem:[#allocation8 + $0x8] sm:$0xff] %vm65, %v242
    // Predicated region
    $region26: #{tpu_custom_call.1} parent=1 // pred_check
      _
    $region27: #{tpu_custom_call.1} parent=1 // pred_check_branch
      %246 = sbr.rel (0) target = $region29
    $region28: #{tpu_custom_call.1} parent=1 // pred_region
      %248 = vsyncadd [#allocation4], 0
      %s249 = sshll.u32 [#allocation8], 4
      %s250 = int_to_ptr.vmem [resolvable:$true] %s249
      %s251 = sshll.u32 %s3, 4
      %s252 = int_to_ptr.hbm [resolvable:$true] %s251
      %257 = dma.vmem_to_hbm [thread:$0]  %s250, 256, %s252, [#allocation4], 128, 128, 8
    $region29: #{tpu_custom_call.1} parent=1 // pred_fallthru
      _
    // Predicated region
    $region30: #{tpu_custom_call.1} parent=1 // pred_check
      _
    $region31: #{tpu_custom_call.1} parent=1 // pred_check_branch
      %259 = sbr.rel (0) target = $region33
    $region32: #{tpu_custom_call.1} parent=1 // pred_region
      %261 = dma.done [#allocation4], 256
    $region33: #{tpu_custom_call.1} parent=1 // pred_fallthru
      _
    %262 = vsyncpa [#allocation3], 1
    %263 = vsyncpa [#allocation6], 1
    %264 = vsyncpa [#allocation4], 1

</llo_original>
